<compile_context>
chip_gen: v6e
topology: v6e:2x2x1
jax: 0.10.0
libtpu: 0.0.40
codegen_flags: <defaults>
</compile_context>

<pallas_src>
import functools

import jax
import jax.numpy as jnp
from jax import lax
from jax.experimental import pallas as pl
from jax.experimental.pallas import tpu as pltpu

_CHUNK = 256  # lanes per in-kernel chunk (2 lane-tiles); keeps live vregs ~30-50.


def _round_up(v, m):
    return ((v + m - 1) // m) * m


def sine_mlp_kernel(x_ref, w1a_ref, w2a_ref, w3_ref, b3_ref, o_ref):
    # x_ref / o_ref: (1, block_n) lane-dense batch slabs.
    block_n = x_ref.shape[1]
    n_chunks = block_n // _CHUNK

    # Tiny weights: load once per grid step (few vregs, loop-invariant).
    w1a = w1a_ref[...]            # (48, 8): [w1 | b1 | 0...], row 40 = ones-generator
    w2a = w2a_ref[...]            # (40, 48): [w2 | b2 | 0...]
    w3c = w3_ref[...]             # (40, 1)
    b3 = b3_ref[...]              # (1, 1)

    # Row-selector for building [x ; 1 ; 1 ...] without a concatenate (hoisted).
    is_row0 = lax.broadcasted_iota(jnp.int32, (8, _CHUNK), 0) == 0

    def body(c, carry):
        start = pl.multiple_of(c * _CHUNK, _CHUNK)
        x = x_ref[:, pl.ds(start, _CHUNK)]                      # (1, C)
        # Augmented input: row 0 = x, rows 1..7 = 1 (only row 1's weight column,
        # the bias, is nonzero; rows 2..7 hit zero weight columns).
        xaug = jnp.where(is_row0, x, 1.0)                       # (8, C)

        # Layer 1 (1 -> 40) on the MXU with the bias folded in; row 40 of w1a is
        # [0, 1, 0, ...] so h1's row 40 is exactly 1 after ReLU (ones row for L2).
        h1 = jnp.maximum(
            jnp.dot(w1a, xaug, preferred_element_type=jnp.float32), 0.0)   # (48, C)

        # Layer 2 (40 -> 40) on the MXU with b2 folded in via h1's ones row.
        h2 = jnp.maximum(
            jnp.dot(w2a, h1, preferred_element_type=jnp.float32), 0.0)     # (40, C)

        # Layer 3 (40 -> 1): VPU multiply + sublane reduce; output stays lane-dense.
        y = jnp.sum(w3c * h2, axis=0, keepdims=True) + b3                  # (1, C)

        o_ref[:, pl.ds(start, _CHUNK)] = y.astype(o_ref.dtype)
        return carry

    lax.fori_loop(0, n_chunks, body, 0)


@functools.partial(jax.jit, static_argnames=("block_n",))
def sine_model_forward(x, w1, b1, w2, b2, w3, b3, *, block_n=65536):
    """Forward pass of SineModel.

    Parameters are in PyTorch layout:
      x  : (N, 1) float32
      w1 : (40, 1),  b1 : (40,)   -- hidden1 = Linear(1, 40)
      w2 : (40, 40), b2 : (40,)   -- hidden2 = Linear(40, 40)
      w3 : (1, 40),  b3 : (1,)    -- out     = Linear(40, 1)
    Returns (N, 1) float32, identical to the relu(F.linear(...)) chain.
    """
    n = x.shape[0]
    dtype = x.dtype

    # Block size: big enough to amortize per-grid-step overhead, capped so the grid
    # keeps >= 2 steps (v7x megacore) when the batch allows it; multiple of _CHUNK.
    tgt = max(_CHUNK, _round_up(int(block_n), _CHUNK))
    half = max(_CHUNK, _round_up(-(-n // 2), _CHUNK))
    blk = min(tgt, half)
    n_pad = _round_up(n, blk)

    # Lane-dense layout: batch on the last (lane) axis. (N,1)->(1,N) is a free
    # metadata reshape; pad only if needed (padded columns are sliced off below).
    xt = x.reshape(1, n)
    if n_pad != n:
        xt = jnp.pad(xt, ((0, 0), (0, n_pad - n)))

    # Bias-augmented, 8-aligned weights (tiny, built once per call).
    w1a = jnp.zeros((48, 8), dtype)
    w1a = w1a.at[:40, 0].set(w1[:, 0])      # weight column (multiplies x)
    w1a = w1a.at[:40, 1].set(b1)            # bias column   (multiplies the 1 row)
    w1a = w1a.at[40, 1].set(1.0)            # ones-generator row -> h1[40] == 1
    w2a = jnp.zeros((40, 48), dtype)
    w2a = w2a.at[:, :40].set(w2)
    w2a = w2a.at[:, 40].set(b2)             # b2 folded via h1's ones row
    w3c = w3.reshape(1, 40).T               # (40, 1)
    b3c = b3.reshape(1, 1)

    grid = (n_pad // blk,)
    in_specs = [
        pl.BlockSpec((1, blk), lambda i: (0, i)),     # x tile (lane-dense)
        pl.BlockSpec((48, 8), lambda i: (0, 0)),      # augmented w1|b1
        pl.BlockSpec((40, 48), lambda i: (0, 0)),     # augmented w2|b2
        pl.BlockSpec((40, 1), lambda i: (0, 0)),      # w3 as a column
        pl.BlockSpec((1, 1), lambda i: (0, 0)),       # b3
    ]
    out_specs = pl.BlockSpec((1, blk), lambda i: (0, i))

    yt = pl.pallas_call(
        sine_mlp_kernel,
        out_shape=jax.ShapeDtypeStruct((1, n_pad), dtype),
        grid_spec=pltpu.PrefetchScalarGridSpec(
            num_scalar_prefetch=0,
            grid=grid,
            in_specs=in_specs,
            out_specs=out_specs,
        ),
        compiler_params=pltpu.CompilerParams(
            dimension_semantics=("parallel",),
            vmem_limit_bytes=32 * 1024 * 1024,
        ),
    )(xt, w1a, w2a, w3c, b3c)

    # Back to the module's (N, 1) layout; drop padded columns (slice + free reshape).
    return yt[:, :n].reshape(n, 1)


def init_linear(key, fan_in, fan_out):
    # nn.Linear default init: U(-1/sqrt(fan_in), 1/sqrt(fan_in)) for weight and bias.
    kw, kb = jax.random.split(key)
    bound = 1.0 / (fan_in ** 0.5)
    w = jax.random.uniform(kw, (fan_out, fan_in), jnp.float32, -bound, bound)  # PyTorch layout
    b = jax.random.uniform(kb, (fan_out,), jnp.float32, -bound, bound)
    return w, b


def reference_forward(x, w1, b1, w2, b2, w3, b3):
    # Pure-JAX mirror of SineModel.forward (F.linear: y = x @ W.T + b).
    hp = jax.lax.Precision.HIGHEST
    h1 = jnp.maximum(jnp.dot(x, w1.T, precision=hp) + b1, 0.0)
    h2 = jnp.maximum(jnp.dot(h1, w2.T, precision=hp) + b2, 0.0)
    return jnp.dot(h2, w3.T, precision=hp) + b3


if __name__ == "__main__":
    key = jax.random.PRNGKey(0)
    kx, k1, k2, k3 = jax.random.split(key, 4)

    # SineModel: hidden1 = Linear(1, 40), hidden2 = Linear(40, 40), out = Linear(40, 1)
    w1, b1 = init_linear(k1, 1, 40)
    w2, b2 = init_linear(k2, 40, 40)
    w3, b3 = init_linear(k3, 40, 1)

    # Not a multiple of any tile size: exercises padding, a 2-step grid (v7x-friendly)
    # and the in-kernel multi-chunk loop (512-lane blocks -> 2 chunks of 256).
    n = 1000
    x = jax.random.uniform(kx, (n, 1), jnp.float32, -5.0, 5.0)

    y = sine_model_forward(x, w1, b1, w2, b2, w3, b3)
    y = jax.block_until_ready(y)

    y_ref = reference_forward(x, w1, b1, w2, b2, w3, b3)
    assert y.shape == (n, 1)
    assert jnp.allclose(y, y_ref, atol=1e-4, rtol=1e-4), "mismatch vs reference"

    print("KERNEL_OK")
</pallas_src>

<mosaic_0001>
module attributes {stable_mosaic.version = 11 : i64} {
  func.func @sine_mlp_kernel(%arg0: i32, %arg1: memref<1x512xf32, #tpu.memory_space<vmem>>, %arg2: memref<48x8xf32, #tpu.memory_space<vmem>>, %arg3: memref<40x48xf32, #tpu.memory_space<vmem>>, %arg4: memref<40x1xf32, #tpu.memory_space<vmem>>, %arg5: memref<1x1xf32, #tpu.memory_space<vmem>>, %arg6: memref<1x512xf32, #tpu.memory_space<vmem>>) attributes {dimension_semantics = [#tpu.dimension_semantics<parallel>], iteration_bounds = array<i64: 2>, scalar_prefetch = 0 : i64, scratch_operands = 0 : i64, tpu.core_type = #tpu.core_type<tc>, window_params = [{transform_indices = @transform_0, window_bounds = array<i64: 1, 512>}, {pipeline_mode = #tpu.pipeline_mode<synchronous>, transform_indices = @transform_1, window_bounds = array<i64: 48, 8>}, {pipeline_mode = #tpu.pipeline_mode<synchronous>, transform_indices = @transform_2, window_bounds = array<i64: 40, 48>}, {pipeline_mode = #tpu.pipeline_mode<synchronous>, transform_indices = @transform_3, window_bounds = array<i64: 40, 1>}, {pipeline_mode = #tpu.pipeline_mode<synchronous>, transform_indices = @transform_4, window_bounds = array<i64: 1, 1>}, {transform_indices = @transform_5, window_bounds = array<i64: 1, 512>}]} {
    %c0 = arith.constant 0 : index
    %c0_0 = arith.constant 0 : index
    %0 = vector.load %arg2[%c0, %c0_0] : memref<48x8xf32, #tpu.memory_space<vmem>>, vector<48x8xf32>
    %c0_1 = arith.constant 0 : index
    %c0_2 = arith.constant 0 : index
    %1 = vector.load %arg3[%c0_1, %c0_2] : memref<40x48xf32, #tpu.memory_space<vmem>>, vector<40x48xf32>
    %c0_3 = arith.constant 0 : index
    %c0_4 = arith.constant 0 : index
    %2 = vector.load %arg4[%c0_3, %c0_4] : memref<40x1xf32, #tpu.memory_space<vmem>>, vector<40x1xf32>
    %c0_5 = arith.constant 0 : index
    %c0_6 = arith.constant 0 : index
    %3 = vector.load %arg5[%c0_5, %c0_6] : memref<1x1xf32, #tpu.memory_space<vmem>>, vector<1x1xf32>
    %4 = tpu.iota {dimensions = array<i32: 0>} : vector<8x256xi32>
    %c0_i32 = arith.constant 0 : i32
    %5 = vector.broadcast %c0_i32 : i32 to vector<8x256xi32>
    %6 = arith.cmpi eq, %4, %5 : vector<8x256xi32>
    %c0_i32_7 = arith.constant 0 : i32
    %c2_i32 = arith.constant 2 : i32
    %7 = arith.addi %c0_i32_7, %c2_i32 : i32
    %c1_i32 = arith.constant 1 : i32
    scf.for %arg7 = %c0_i32_7 to %7 step %c1_i32  : i32 {
      %c256_i32 = arith.constant 256 : i32
      %8 = arith.muli %arg7, %c256_i32 : i32
      %9 = tpu.assume_multiple %8, 256 : i32
      %c0_9 = arith.constant 0 : index
      %10 = arith.index_cast %9 : i32 to index
      %11 = vector.load %arg1[%c0_9, %10] : memref<1x512xf32, #tpu.memory_space<vmem>>, vector<1x256xf32>
      %cst = arith.constant 1.000000e+00 : f32
      %12 = vector.shape_cast %11 : vector<1x256xf32> to vector<1x256xf32>
      %13 = vector.broadcast %12 : vector<1x256xf32> to vector<8x256xf32>
      %14 = vector.broadcast %cst : f32 to vector<8x256xf32>
      %15 = arith.select %6, %13, %14 : vector<8x256xi1>, vector<8x256xf32>
      %cst_10 = arith.constant dense<0.000000e+00> : vector<48x256xf32>
      %16 = tpu.matmul %0, %15, %cst_10 {dimension_numbers = #tpu.dot_dimension_numbers<[1], [0], [0], [1], [0, 0, 1, 1], [], []>} : vector<48x8xf32>, vector<8x256xf32>, vector<48x256xf32> -> vector<48x256xf32>
      %cst_11 = arith.constant 0.000000e+00 : f32
      %17 = vector.broadcast %cst_11 : f32 to vector<48x256xf32>
      %18 = arith.maximumf %16, %17 : vector<48x256xf32>
      %cst_12 = arith.constant dense<0.000000e+00> : vector<40x256xf32>
      %19 = tpu.matmul %1, %18, %cst_12 {dimension_numbers = #tpu.dot_dimension_numbers<[1], [0], [0], [1], [0, 0, 1, 1], [], []>} : vector<40x48xf32>, vector<48x256xf32>, vector<40x256xf32> -> vector<40x256xf32>
      %cst_13 = arith.constant 0.000000e+00 : f32
      %20 = vector.broadcast %cst_13 : f32 to vector<40x256xf32>
      %21 = arith.maximumf %19, %20 : vector<40x256xf32>
      %22 = vector.broadcast %2 : vector<40x1xf32> to vector<40x256xf32>
      %23 = arith.mulf %22, %21 : vector<40x256xf32>
      %cst_14 = arith.constant dense<0.000000e+00> : vector<256xf32>
      %24 = vector.multi_reduction <add>, %23, %cst_14 [0] : vector<40x256xf32> to vector<256xf32>
      %25 = vector.shape_cast %24 : vector<256xf32> to vector<1x256xf32>
      %26 = vector.broadcast %3 : vector<1x1xf32> to vector<1x256xf32>
      %27 = arith.addf %25, %26 : vector<1x256xf32>
      %c0_15 = arith.constant 0 : index
      %28 = arith.index_cast %9 : i32 to index
      %29 = vector.load %arg6[%c0_15, %28] : memref<1x512xf32, #tpu.memory_space<vmem>>, vector<1x256xf32>
      tpu.vector_store %arg6[%c0_15, %28], %27 {strides = array<i32>} : memref<1x512xf32, #tpu.memory_space<vmem>>, vector<1x256xf32>,
    }
    %c2_i32_8 = arith.constant 2 : i32
    return
  }
  func.func @transform_0(%arg0: i32) -> (i32, i32) {
    %c0_i32 = arith.constant 0 : i32
    %c0_i32_0 = arith.constant 0 : i32
    return %c0_i32, %arg0 : i32, i32
  }
  func.func @transform_1(%arg0: i32) -> (i32, i32) {
    %c0_i32 = arith.constant 0 : i32
    %c0_i32_0 = arith.constant 0 : i32
    %c0_i32_1 = arith.constant 0 : i32
    return %c0_i32, %c0_i32_0 : i32, i32
  }
  func.func @transform_2(%arg0: i32) -> (i32, i32) {
    %c0_i32 = arith.constant 0 : i32
    %c0_i32_0 = arith.constant 0 : i32
    %c0_i32_1 = arith.constant 0 : i32
    return %c0_i32, %c0_i32_0 : i32, i32
  }
  func.func @transform_3(%arg0: i32) -> (i32, i32) {
    %c0_i32 = arith.constant 0 : i32
    %c0_i32_0 = arith.constant 0 : i32
    %c0_i32_1 = arith.constant 0 : i32
    return %c0_i32, %c0_i32_0 : i32, i32
  }
  func.func @transform_4(%arg0: i32) -> (i32, i32) {
    %c0_i32 = arith.constant 0 : i32
    %c0_i32_0 = arith.constant 0 : i32
    %c0_i32_1 = arith.constant 0 : i32
    return %c0_i32, %c0_i32_0 : i32, i32
  }
  func.func @transform_5(%arg0: i32) -> (i32, i32) {
    %c0_i32 = arith.constant 0 : i32
    %c0_i32_0 = arith.constant 0 : i32
    return %c0_i32, %arg0 : i32, i32
  }
}

</mosaic_0001>

<llo_original>
// kernel: sine_model_forward.1
$region0: #{sine_model_forward.1}
  #allocation0 [shape = 'u32[]', space=smem, size = 0x4, offset = 0x4, fixed_abs, tag = 'smem constant byte address 0x4 - core index']
  #allocation1 [shape = 'u32[144,128]{1,0:T(1,128)}', space=vmem, size = 0x12000, scoped, tag = 'internal scratch']
  #allocation2 [shape = 'f32[1,1]{1,0:T(1,128)S(1)}', space=vmem, size = 0x200, scoped, tag = 'scoped memory for sine_model_forward.1']
  %s0 = inlined_call_operand.vmem [shape: f32[1,1024], index: 0, kind: input, shape index: {}]
  %s1 = inlined_call_operand.vmem [shape: f32[48,8], index: 1, kind: input, shape index: {}]
  %s2 = inlined_call_operand.vmem [shape: f32[40,48], index: 2, kind: input, shape index: {}]
  %s3 = inlined_call_operand.vmem [shape: f32[40,1], index: 3, kind: input, shape index: {}]
  %s4 = inlined_call_operand.<no memory space> [shape: f32[1,1], index: 4, kind: input, shape index: {}]
  %s5 = inlined_call_operand.vmem [shape: f32[1,1024], index: 5, kind: output, shape index: {}]
  %s6 = sld [smem:[#allocation0]]
  $region60: #{sine_model_forward.1} parent=0
    _
  %s8 = ssub.s32 1, %s6
  %s9 = scalar_select 0, %s8, %s6
  %v10 = vstv %s4
  %11 = vst [vmem:[#allocation2] sm:$0x1] %v10
  loop: start=0, step=1, limit=4
  $region2: #{sine_model_forward.1} parent=0 // loop_pre_header
    _
  $region3: #{sine_model_forward.1} parent=0 // loop_header
    %s13 = sphi 0, %s17
    %p14 = scmp.ge.s32.totalorder %s13, 4
    %s23 = sphi 0, %s25
    %s26 = sphi 0, %s23
    %s27 = sphi 0, %s26
    %s43 = sphi 0, %s27
    %s47 = sphi 0, %s47
    %s49 = sphi 0, %s47
    %s50 = sphi 0, %s49
    %s64 = sphi 0, %s50
    %s68 = sphi 0, %s68
    %s70 = sphi 0, %s68
    %s71 = sphi 0, %s70
    %s85 = sphi 0, %s71
    %s89 = sphi 0, %s89
    %s91 = sphi 0, %s89
    %s92 = sphi 0, %s91
    %s106 = sphi 0, %s92
    %s110 = sphi 0, %s110
    %s112 = sphi 0, %s110
    %s113 = sphi 0, %s112
    %s127 = sphi 0, %s113
    %s133 = sphi 0, %s135
    %s136 = sphi 0, %s133
    %s137 = sphi 0, %s136
    %s153 = sphi 0, %s137
  $region4: #{sine_model_forward.1} parent=0 // loop_header_branch
    %16 = sbr.rel (%p14) target = $region8
  $region5: #{sine_model_forward.1} parent=0 // loop_body
    %s18 = ssub.s32 %s13, 1
    %s19 = ssub.s32 %s13, 2
    %s20 = sadd.s32 %s13, 1
    %s21 = ssub.s32 %s13, %s20
    %p22 = scmp.eq.s32.totalorder %s21, 0
    %s24 = sadd.s32 %s23, 1
    %s25 = scalar_select %p22, %s23, %s24
    %p28 = pneg %p22
    %p29 = scmp.eq.s32.totalorder %s13, 1
    %p30 = por %p28, %p29
    %p31 = scmp.ne.s32.totalorder %s23, %s26
    %p32 = scmp.eq.s32.totalorder %s13, 0
    %p33 = por %p31, %p32
    %p34 = scmp.ne.s32.totalorder %s23, %s26
    %p35 = scmp.eq.s32.totalorder %s18, 1
    %p36 = por %p34, %p35
    %p37 = scmp.ne.s32.totalorder %s26, %s27
    %p38 = scmp.eq.s32.totalorder %s18, 0
    %p39 = por %p37, %p38
    %p40 = scmp.ne.s32.totalorder %s26, %s27
    %p41 = scmp.eq.s32.totalorder %s19, 1
    %p42 = por %p40, %p41
    %p44 = scmp.ne.s32.totalorder %s27, %s43
    %p45 = scmp.eq.s32.totalorder %s19, 0
    %p46 = por %p44, %p45
    %s48 = sadd.s32 %s47, 1
    %p51 = scmp.eq.s32.totalorder %s13, 1
    %p52 = scmp.ne.s32.totalorder %s47, %s49
    %p53 = scmp.eq.s32.totalorder %s13, 0
    %p54 = por %p52, %p53
    %p55 = scmp.ne.s32.totalorder %s47, %s49
    %p56 = scmp.eq.s32.totalorder %s18, 1
    %p57 = por %p55, %p56
    %p58 = scmp.ne.s32.totalorder %s49, %s50
    %p59 = scmp.eq.s32.totalorder %s18, 0
    %p60 = por %p58, %p59
    %p61 = scmp.ne.s32.totalorder %s49, %s50
    %p62 = scmp.eq.s32.totalorder %s19, 1
    %p63 = por %p61, %p62
    %p65 = scmp.ne.s32.totalorder %s50, %s64
    %p66 = scmp.eq.s32.totalorder %s19, 0
    %p67 = por %p65, %p66
    %s69 = sadd.s32 %s68, 1
    %p72 = scmp.eq.s32.totalorder %s13, 1
    %p73 = scmp.ne.s32.totalorder %s68, %s70
    %p74 = scmp.eq.s32.totalorder %s13, 0
    %p75 = por %p73, %p74
    %p76 = scmp.ne.s32.totalorder %s68, %s70
    %p77 = scmp.eq.s32.totalorder %s18, 1
    %p78 = por %p76, %p77
    %p79 = scmp.ne.s32.totalorder %s70, %s71
    %p80 = scmp.eq.s32.totalorder %s18, 0
    %p81 = por %p79, %p80
    %p82 = scmp.ne.s32.totalorder %s70, %s71
    %p83 = scmp.eq.s32.totalorder %s19, 1
    %p84 = por %p82, %p83
    %p86 = scmp.ne.s32.totalorder %s71, %s85
    %p87 = scmp.eq.s32.totalorder %s19, 0
    %p88 = por %p86, %p87
    %s90 = sadd.s32 %s89, 1
    %p93 = scmp.eq.s32.totalorder %s13, 1
    %p94 = scmp.ne.s32.totalorder %s89, %s91
    %p95 = scmp.eq.s32.totalorder %s13, 0
    %p96 = por %p94, %p95
    %p97 = scmp.ne.s32.totalorder %s89, %s91
    %p98 = scmp.eq.s32.totalorder %s18, 1
    %p99 = por %p97, %p98
    %p100 = scmp.ne.s32.totalorder %s91, %s92
    %p101 = scmp.eq.s32.totalorder %s18, 0
    %p102 = por %p100, %p101
    %p103 = scmp.ne.s32.totalorder %s91, %s92
    %p104 = scmp.eq.s32.totalorder %s19, 1
    %p105 = por %p103, %p104
    %p107 = scmp.ne.s32.totalorder %s92, %s106
    %p108 = scmp.eq.s32.totalorder %s19, 0
    %p109 = por %p107, %p108
    %s111 = sadd.s32 %s110, 1
    %p114 = scmp.eq.s32.totalorder %s13, 1
    %p115 = scmp.ne.s32.totalorder %s110, %s112
    %p116 = scmp.eq.s32.totalorder %s13, 0
    %p117 = por %p115, %p116
    %p118 = scmp.ne.s32.totalorder %s110, %s112
    %p119 = scmp.eq.s32.totalorder %s18, 1
    %p120 = por %p118, %p119
    %p121 = scmp.ne.s32.totalorder %s112, %s113
    %p122 = scmp.eq.s32.totalorder %s18, 0
    %p123 = por %p121, %p122
    %p124 = scmp.ne.s32.totalorder %s112, %s113
    %p125 = scmp.eq.s32.totalorder %s19, 1
    %p126 = por %p124, %p125
    %p128 = scmp.ne.s32.totalorder %s113, %s127
    %p129 = scmp.eq.s32.totalorder %s19, 0
    %p130 = por %p128, %p129
    %s131 = ssub.s32 %s13, %s20
    %p132 = scmp.eq.s32.totalorder %s131, 0
    %s134 = sadd.s32 %s133, 1
    %s135 = scalar_select %p132, %s133, %s134
    %p138 = pneg %p132
    %p139 = scmp.eq.s32.totalorder %s13, 1
    %p140 = por %p138, %p139
    %p141 = scmp.ne.s32.totalorder %s133, %s136
    %p142 = scmp.eq.s32.totalorder %s13, 0
    %p143 = por %p141, %p142
    %p144 = scmp.ne.s32.totalorder %s133, %s136
    %p145 = scmp.eq.s32.totalorder %s18, 1
    %p146 = por %p144, %p145
    %p147 = scmp.ne.s32.totalorder %s136, %s137
    %p148 = scmp.eq.s32.totalorder %s18, 0
    %p149 = por %p147, %p148
    %p150 = scmp.ne.s32.totalorder %s136, %s137
    %p151 = scmp.eq.s32.totalorder %s19, 1
    %p152 = por %p150, %p151
    %p154 = scmp.ne.s32.totalorder %s137, %s153
    %p155 = scmp.eq.s32.totalorder %s19, 0
    %p156 = por %p154, %p155
    %p157 = scmp.le.s32.totalorder 1, %s13
    %p158 = scmp.lt.s32.totalorder %s13, 3
    %p159 = pnand %p157, %p158
    %p160 = pneg %p159
    // Predicated region
    $region9: #{sine_model_forward.1} parent=5 // pred_check
      _
    $region10: #{sine_model_forward.1} parent=5 // pred_check_branch
      %162 = sbr.rel (%p159) target = $region12
    $region11: #{sine_model_forward.1} parent=5 // pred_region
      %s163 = ssub.s32 %s13, 1
      // Predicated region
      $region13: #{sine_model_forward.1} parent=11 // pred_check
        %p164 = pneg %p60
      $region14: #{sine_model_forward.1} parent=11 // pred_check_branch
        %166 = sbr.rel (%p164) target = $region16
      $region15: #{sine_model_forward.1} parent=11 // pred_region
        _
      $region16: #{sine_model_forward.1} parent=11 // pred_fallthru
        _
      // Predicated region
      $region17: #{sine_model_forward.1} parent=11 // pred_check
        %p167 = pneg %p81
      $region18: #{sine_model_forward.1} parent=11 // pred_check_branch
        %169 = sbr.rel (%p167) target = $region20
      $region19: #{sine_model_forward.1} parent=11 // pred_region
        _
      $region20: #{sine_model_forward.1} parent=11 // pred_fallthru
        _
      // Predicated region
      $region21: #{sine_model_forward.1} parent=11 // pred_check
        %p170 = pneg %p102
      $region22: #{sine_model_forward.1} parent=11 // pred_check_branch
        %172 = sbr.rel (%p170) target = $region24
      $region23: #{sine_model_forward.1} parent=11 // pred_region
        _
      $region24: #{sine_model_forward.1} parent=11 // pred_fallthru
        _
      // Predicated region
      $region25: #{sine_model_forward.1} parent=11 // pred_check
        %p173 = pneg %p123
      $region26: #{sine_model_forward.1} parent=11 // pred_check_branch
        %175 = sbr.rel (%p173) target = $region28
      $region27: #{sine_model_forward.1} parent=11 // pred_region
        _
      $region28: #{sine_model_forward.1} parent=11 // pred_fallthru
        _
    $region12: #{sine_model_forward.1} parent=5 // pred_fallthru
      _
    %p176 = scmp.lt.s32.totalorder %s13, 2
    // Predicated region
    $region29: #{sine_model_forward.1} parent=5 // pred_check
      %p177 = pneg %p176
    $region30: #{sine_model_forward.1} parent=5 // pred_check_branch
      %179 = sbr.rel (%p177) target = $region32
    $region31: #{sine_model_forward.1} parent=5 // pred_region
      // Predicated region
      $region33: #{sine_model_forward.1} parent=31 // pred_check
        %p180 = pneg %p33
      $region34: #{sine_model_forward.1} parent=31 // pred_check_branch
        %182 = sbr.rel (%p180) target = $region36
      $region35: #{sine_model_forward.1} parent=31 // pred_region
        %s183 = smul.u32 4, %s13
        %p184 = scmp.lt.s32.totalorder %s183, 7
        %s185 = scalar_select %p184, %s183, 7
        %s186 = scalar_lea.vmem %s0, %s185
        %s187 = smul.u32 4, %s13
      $region36: #{sine_model_forward.1} parent=31 // pred_fallthru
        _
    $region32: #{sine_model_forward.1} parent=5 // pred_fallthru
      _
    %p188 = scmp.le.s32.totalorder 1, %s13
    %p189 = scmp.lt.s32.totalorder %s13, 3
    %p190 = pnand %p188, %p189
    %p191 = pneg %p190
    // Predicated region
    $region37: #{sine_model_forward.1} parent=5 // pred_check
      _
    $region38: #{sine_model_forward.1} parent=5 // pred_check_branch
      %193 = sbr.rel (%p190) target = $region40
    $region39: #{sine_model_forward.1} parent=5 // pred_region
      %s194 = ssub.s32 %s13, 1
      %s195 = smul.u32 4, %s18
      %p196 = scmp.lt.s32.totalorder %s195, 7
      %s197 = scalar_select %p196, %s195, 7
      %s198 = scalar_lea.vmem %s0, %s197
      %p199 = pneg %p39
      %p200 = pneg %p36
      %p201 = pneg %p60
      %p202 = pneg %p57
      %p203 = pneg %p81
      %p204 = pneg %p78
      %p205 = pneg %p102
      %p206 = pneg %p99
      %p207 = pneg %p123
      %p208 = pneg %p120
      %p209 = pneg %p149
      %p210 = pneg %p146
      %s211 = smul.u32 4, %s18
      %p212 = scmp.lt.s32.totalorder %s211, 7
      %s213 = scalar_select %p212, %s211, 7
      %s214 = scalar_lea.vmem %s5, %s213
      %s215 = smul.u32 4, %s18
      %p216 = scmp.lt.s32.totalorder %s215, 7
      %s217 = scalar_select %p216, %s215, 7
      %s218 = scalar_lea.vmem %s0, %s217
      %s219 = smul.u32 4, %s18
      %s220 = smul.u32 4, %s18
      %p221 = scmp.lt.s32.totalorder %s220, 7
      %s222 = scalar_select %p221, %s220, 7
      %s223 = scalar_lea.vmem %s5, %s222
      %s224 = smul.u32 4, %s18
      %v225 = vld [vmem:[%s1] sm:$0xff]
      %v226 = vld [vmem:[%s1 + $0x8] sm:$0xff]
      %v227 = vld [vmem:[%s1 + $0x10] sm:$0xff]
      %v228 = vld [vmem:[%s1 + $0x18] sm:$0xff]
      %v229 = vld [vmem:[%s1 + $0x20] sm:$0xff]
      %v230 = vld [vmem:[%s1 + $0x28] sm:$0xff]
      %v231 = vld [vmem:[%s2] sm:$0xff]
      %v232 = vld [vmem:[%s2 + $0x8] sm:$0xff]
      %v233 = vld [vmem:[%s2 + $0x10] sm:$0xff]
      %v234 = vld [vmem:[%s2 + $0x18] sm:$0xff]
      %v235 = vld [vmem:[%s2 + $0x20] sm:$0xff]
      %v236 = vld [vmem:[%s3] sm:$0xff]
      %v237 = vld [vmem:[%s3 + $0x8] sm:$0xff]
      %v238 = vld [vmem:[%s3 + $0x10] sm:$0xff]
      %v239 = vld [vmem:[%s3 + $0x18] sm:$0xff]
      %v240 = vld [vmem:[%s3 + $0x20] sm:$0xff]
      %v241 = vld [vmem:[#allocation2] sm:$0x1]
      %v242 = vlaneseq
      %v243 = vshrl.u32 %v242, 7
      %vm244 = vcmp.eq.s32.totalorder %v243, 0
      loop: start=0, step=1, limit=2
      $region41: #{sine_model_forward.1} parent=39 // loop_pre_header
        _
      $region42: #{sine_model_forward.1} parent=39 // loop_header
        %s246 = sphi 0, %s250
        %p247 = scmp.ge.s32.totalorder %s246, 2
      $region43: #{sine_model_forward.1} parent=39 // loop_header_branch
        %249 = sbr.rel (%p247) target = $region47
      $region44: #{sine_model_forward.1} parent=39 // loop_body
        %s251 = smul.u32 %s246, 256
        %s252 = sshra.s32 %s251, 7
        %s253 = sand.u32 %s251, 127
        %s254 = scalar_lea.vmem %s218, %s252
        %v255 = vld [vmem:[%s254] sm:$0x3]
        %v257 = vlaneseq
        %v258 = vshrl.u32 %v257, 7
        %v259 = vsub.s32 0, %v258
        %v260 = vrot.slane %v255, %v259
        %v261 = vlaneseq
        %v262 = vshrl.u32 %v261, 7
        %v263 = vsub.s32 1, %v262
        %v264 = vrot.slane %v255, %v263
        %v267 = vsel %vm244, %v260, 1.0
        %v268 = vsel %vm244, %v264, 1.0
        %vm269 = vcmask 64512
        %v271 = vsel %vm269, %v225, 0
        %v274 = vsel %vm269, %v226, 0
        %v277 = vsel %vm269, %v227, 0
        %v280 = vsel %vm269, %v228, 0
        %v283 = vsel %vm269, %v229, 0
        %v286 = vsel %vm269, %v230, 0
        %288 = vmatprep.subr.mxu0 0.0
        %289 = vmatpush1.msra.mxu0 0.0
        %290 = vmatprep.subr.mxu0 0.0
        %291 = vmatpush1.msra.mxu0 0.0
        %292 = vmatprep.subr.mxu0 0.0
        %293 = vmatpush1.msra.mxu0 0.0
        %294 = vmatprep.subr.mxu0 0.0
        %295 = vmatpush1.msra.mxu0 0.0
        %296 = vmatprep.subr.mxu0 0.0
        %297 = vmatpush1.msra.mxu0 0.0
        %298 = vmatprep.subr.mxu0 0.0
        %299 = vmatpush1.msra.mxu0 0.0
        %300 = vmatprep.subr.mxu0 0.0
        %301 = vmatpush1.msra.mxu0 0.0
        %302 = vmatprep.subr.mxu0 0.0
        %303 = vmatpush1.msra.mxu0 0.0
        %304 = vmatprep.subr.mxu0 0.0
        %305 = vmatpush1.msra.mxu0 0.0
        %306 = vmatprep.subr.mxu0 0.0
        %307 = vmatpush1.msra.mxu0 0.0
        %308 = vmatprep.subr.mxu0 0.0
        %309 = vmatpush1.msra.mxu0 0.0
        %310 = vmatprep.subr.mxu0 0.0
        %311 = vmatpush1.msra.mxu0 0.0
        %312 = vmatprep.subr.mxu0 0.0
        %313 = vmatpush1.msra.mxu0 0.0
        %314 = vmatprep.subr.mxu0 0.0
        %315 = vmatpush1.msra.mxu0 0.0
        %316 = vmatprep.subr.mxu0 0.0
        %317 = vmatpush1.msra.mxu0 0.0
        %318 = vmatprep.subr.mxu0 %v268
        %319 = vmatpush1.msra.mxu0 %v267
        %320 = vmatprep.subr.mxu0 0.0
        %321 = vmatpush2.msra.mxu0 0.0
        %322 = vmatprep.subr.mxu0 0.0
        %323 = vmatpush2.msra.mxu0 0.0
        %324 = vmatprep.subr.mxu0 0.0
        %325 = vmatpush2.msra.mxu0 0.0
        %326 = vmatprep.subr.mxu0 0.0
        %327 = vmatpush2.msra.mxu0 0.0
        %328 = vmatprep.subr.mxu0 0.0
        %329 = vmatpush2.msra.mxu0 0.0
        %330 = vmatprep.subr.mxu0 0.0
        %331 = vmatpush2.msra.mxu0 0.0
        %332 = vmatprep.subr.mxu0 0.0
        %333 = vmatpush2.msra.mxu0 0.0
        %334 = vmatprep.subr.mxu0 0.0
        %335 = vmatpush2.msra.mxu0 0.0
        %336 = vmatprep.subr.mxu0 0.0
        %337 = vmatpush2.msra.mxu0 0.0
        %338 = vmatprep.subr.mxu0 0.0
        %339 = vmatpush2.msra.mxu0 0.0
        %340 = vmatprep.subr.mxu0 0.0
        %341 = vmatpush2.msra.mxu0 0.0
        %342 = vmatprep.subr.mxu0 0.0
        %343 = vmatpush2.msra.mxu0 0.0
        %344 = vmatprep.subr.mxu0 0.0
        %345 = vmatpush2.msra.mxu0 0.0
        %346 = vmatprep.subr.mxu0 0.0
        %347 = vmatpush2.msra.mxu0 0.0
        %348 = vmatprep.subr.mxu0 0.0
        %349 = vmatpush2.msra.mxu0 0.0
        %350 = vmatprep.subr.mxu0 0.0
        %351 = vmatpush2.msra.mxu0 0.0
        %352 = vmatprep.mubr.f32.mxu0 0.0
        %353 = vmatmul.mubr.f32.gmra.mxu0 %v271
        %v354 = vpop.f32.mrf.mxu0
        %v355 = vadd.f32 0.0, %v354
        %v356 = vpop.f32.mrf.mxu0
        %v357 = vadd.f32 0.0, %v356
        %358 = vmatprep.mubr.f32.mxu0 0.0
        %359 = vmatmul.mubr.f32.gmra.mxu0 %v274
        %v360 = vpop.f32.mrf.mxu0
        %v361 = vadd.f32 0.0, %v360
        %v362 = vpop.f32.mrf.mxu0
        %v363 = vadd.f32 0.0, %v362
        %364 = vmatprep.mubr.f32.mxu0 0.0
        %365 = vmatmul.mubr.f32.gmra.mxu0 %v277
        %v366 = vpop.f32.mrf.mxu0
        %v367 = vadd.f32 0.0, %v366
        %v368 = vpop.f32.mrf.mxu0
        %v369 = vadd.f32 0.0, %v368
        %370 = vmatprep.mubr.f32.mxu0 0.0
        %371 = vmatmul.mubr.f32.gmra.mxu0 %v280
        %v372 = vpop.f32.mrf.mxu0
        %v373 = vadd.f32 0.0, %v372
        %v374 = vpop.f32.mrf.mxu0
        %v375 = vadd.f32 0.0, %v374
        %376 = vmatprep.mubr.f32.mxu0 0.0
        %377 = vmatmul.mubr.f32.gmra.mxu0 %v283
        %v378 = vpop.f32.mrf.mxu0
        %v379 = vadd.f32 0.0, %v378
        %v380 = vpop.f32.mrf.mxu0
        %v381 = vadd.f32 0.0, %v380
        %382 = vmatprep.mubr.f32.mxu0 0.0
        %383 = vmatmul.mubr.f32.gmra.mxu0 %v286
        %v384 = vpop.f32.mrf.mxu0
        %v385 = vadd.f32 0.0, %v384
        %v386 = vpop.f32.mrf.mxu0
        %v387 = vadd.f32 0.0, %v386
        %388 = vdwg.mxu0
        %v389 = vmax.f32 %v355, 0.0
        %v390 = vmax.f32 %v357, 0.0
        %v391 = vmax.f32 %v361, 0.0
        %v392 = vmax.f32 %v363, 0.0
        %v393 = vmax.f32 %v367, 0.0
        %v394 = vmax.f32 %v369, 0.0
        %v395 = vmax.f32 %v373, 0.0
        %v396 = vmax.f32 %v375, 0.0
        %v397 = vmax.f32 %v379, 0.0
        %v398 = vmax.f32 %v381, 0.0
        %v399 = vmax.f32 %v385, 0.0
        %v400 = vmax.f32 %v387, 0.0
        %vm401 = vcmask 392192
        %v403 = vsel %vm401, %v231, 0
        %v406 = vsel %vm401, %v232, 0
        %v409 = vsel %vm401, %v233, 0
        %v412 = vsel %vm401, %v234, 0
        %v415 = vsel %vm401, %v235, 0
        %417 = vmatprep.subr.mxu0 0.0
        %418 = vmatpush1.msra.mxu0 0.0
        %419 = vmatprep.subr.mxu0 0.0
        %420 = vmatpush1.msra.mxu0 0.0
        %421 = vmatprep.subr.mxu0 0.0
        %422 = vmatpush1.msra.mxu0 0.0
        %423 = vmatprep.subr.mxu0 0.0
        %424 = vmatpush1.msra.mxu0 0.0
        %425 = vmatprep.subr.mxu0 0.0
        %426 = vmatpush1.msra.mxu0 0.0
        %427 = vmatprep.subr.mxu0 0.0
        %428 = vmatpush1.msra.mxu0 0.0
        %429 = vmatprep.subr.mxu0 0.0
        %430 = vmatpush1.msra.mxu0 0.0
        %431 = vmatprep.subr.mxu0 0.0
        %432 = vmatpush1.msra.mxu0 0.0
        %433 = vmatprep.subr.mxu0 0.0
        %434 = vmatpush1.msra.mxu0 0.0
        %435 = vmatprep.subr.mxu0 0.0
        %436 = vmatpush1.msra.mxu0 0.0
        %437 = vmatprep.subr.mxu0 %v400
        %438 = vmatpush1.msra.mxu0 %v399
        %439 = vmatprep.subr.mxu0 %v398
        %440 = vmatpush1.msra.mxu0 %v397
        %441 = vmatprep.subr.mxu0 %v396
        %442 = vmatpush1.msra.mxu0 %v395
        %443 = vmatprep.subr.mxu0 %v394
        %444 = vmatpush1.msra.mxu0 %v393
        %445 = vmatprep.subr.mxu0 %v392
        %446 = vmatpush1.msra.mxu0 %v391
        %447 = vmatprep.subr.mxu0 %v390
        %448 = vmatpush1.msra.mxu0 %v389
        %449 = vmatprep.subr.mxu0 0.0
        %450 = vmatpush2.msra.mxu0 0.0
        %451 = vmatprep.subr.mxu0 0.0
        %452 = vmatpush2.msra.mxu0 0.0
        %453 = vmatprep.subr.mxu0 0.0
        %454 = vmatpush2.msra.mxu0 0.0
        %455 = vmatprep.subr.mxu0 0.0
        %456 = vmatpush2.msra.mxu0 0.0
        %457 = vmatprep.subr.mxu0 0.0
        %458 = vmatpush2.msra.mxu0 0.0
        %459 = vmatprep.subr.mxu0 0.0
        %460 = vmatpush2.msra.mxu0 0.0
        %461 = vmatprep.subr.mxu0 0.0
        %462 = vmatpush2.msra.mxu0 0.0
        %463 = vmatprep.subr.mxu0 0.0
        %464 = vmatpush2.msra.mxu0 0.0
        %465 = vmatprep.subr.mxu0 0.0
        %466 = vmatpush2.msra.mxu0 0.0
        %467 = vmatprep.subr.mxu0 0.0
        %468 = vmatpush2.msra.mxu0 0.0
        %469 = vmatprep.subr.mxu0 0.0
        %470 = vmatpush2.msra.mxu0 0.0
        %471 = vmatprep.subr.mxu0 0.0
        %472 = vmatpush2.msra.mxu0 0.0
        %473 = vmatprep.subr.mxu0 0.0
        %474 = vmatpush2.msra.mxu0 0.0
        %475 = vmatprep.subr.mxu0 0.0
        %476 = vmatpush2.msra.mxu0 0.0
        %477 = vmatprep.subr.mxu0 0.0
        %478 = vmatpush2.msra.mxu0 0.0
        %479 = vmatprep.subr.mxu0 0.0
        %480 = vmatpush2.msra.mxu0 0.0
        %481 = vmatprep.mubr.f32.mxu0 0.0
        %482 = vmatmul.mubr.f32.gmra.mxu0 %v403
        %v483 = vpop.f32.mrf.mxu0
        %v484 = vadd.f32 0.0, %v483
        %v485 = vpop.f32.mrf.mxu0
        %v486 = vadd.f32 0.0, %v485
        %487 = vmatprep.mubr.f32.mxu0 0.0
        %488 = vmatmul.mubr.f32.gmra.mxu0 %v406
        %v489 = vpop.f32.mrf.mxu0
        %v490 = vadd.f32 0.0, %v489
        %v491 = vpop.f32.mrf.mxu0
        %v492 = vadd.f32 0.0, %v491
        %493 = vmatprep.mubr.f32.mxu0 0.0
        %494 = vmatmul.mubr.f32.gmra.mxu0 %v409
        %v495 = vpop.f32.mrf.mxu0
        %v496 = vadd.f32 0.0, %v495
        %v497 = vpop.f32.mrf.mxu0
        %v498 = vadd.f32 0.0, %v497
        %499 = vmatprep.mubr.f32.mxu0 0.0
        %500 = vmatmul.mubr.f32.gmra.mxu0 %v412
        %v501 = vpop.f32.mrf.mxu0
        %v502 = vadd.f32 0.0, %v501
        %v503 = vpop.f32.mrf.mxu0
        %v504 = vadd.f32 0.0, %v503
        %505 = vmatprep.mubr.f32.mxu0 0.0
        %506 = vmatmul.mubr.f32.gmra.mxu0 %v415
        %v507 = vpop.f32.mrf.mxu0
        %v508 = vadd.f32 0.0, %v507
        %v509 = vpop.f32.mrf.mxu0
        %v510 = vadd.f32 0.0, %v509
        %511 = vdwg.mxu0
        %v512 = vmax.f32 %v484, 0.0
        %v513 = vmax.f32 %v486, 0.0
        %v514 = vmax.f32 %v490, 0.0
        %v515 = vmax.f32 %v492, 0.0
        %v516 = vmax.f32 %v496, 0.0
        %v517 = vmax.f32 %v498, 0.0
        %v518 = vmax.f32 %v502, 0.0
        %v519 = vmax.f32 %v504, 0.0
        %v520 = vmax.f32 %v508, 0.0
        %v521 = vmax.f32 %v510, 0.0
        %523 = vset.pattern.permute.xlu0 0
        %524 = vperm.xlu0 %523, %v236
        %v525 = vpop.permute.xlu0 %524
        %528 = vset.pattern.permute.xlu0 0
        %529 = vperm.xlu0 %528, %v237
        %v530 = vpop.permute.xlu0 %529
        %533 = vset.pattern.permute.xlu0 0
        %534 = vperm.xlu0 %533, %v238
        %v535 = vpop.permute.xlu0 %534
        %538 = vset.pattern.permute.xlu0 0
        %539 = vperm.xlu0 %538, %v239
        %v540 = vpop.permute.xlu0 %539
        %543 = vset.pattern.permute.xlu0 0
        %544 = vperm.xlu0 %543, %v240
        %v545 = vpop.permute.xlu0 %544
        %v547 = vmul.f32 %v525, %v512
        %v548 = vmul.f32 %v525, %v513
        %v549 = vmul.f32 %v530, %v514
        %v550 = vmul.f32 %v530, %v515
        %v551 = vmul.f32 %v535, %v516
        %v552 = vmul.f32 %v535, %v517
        %v553 = vmul.f32 %v540, %v518
        %v554 = vmul.f32 %v540, %v519
        %v555 = vmul.f32 %v545, %v520
        %v556 = vmul.f32 %v545, %v521
        %v557 = vadd.f32 %v547, %v549
        %v558 = vadd.f32 %v557, %v551
        %v559 = vadd.f32 %v558, %v553
        %v560 = vadd.f32 %v559, %v555
        %v561 = vrot.slane %v560, 4
        %v562 = vadd.f32 %v560, %v561
        %v563 = vrot.slane %v562, 2
        %v564 = vadd.f32 %v562, %v563
        %v565 = vrot.slane %v564, 1
        %v566 = vadd.f32 %v564, %v565
        %v567 = vadd.f32 %v548, %v550
        %v568 = vadd.f32 %v567, %v552
        %v569 = vadd.f32 %v568, %v554
        %v570 = vadd.f32 %v569, %v556
        %v571 = vrot.slane %v570, 4
        %v572 = vadd.f32 %v570, %v571
        %v573 = vrot.slane %v572, 2
        %v574 = vadd.f32 %v572, %v573
        %v575 = vrot.slane %v574, 1
        %v576 = vadd.f32 %v574, %v575
        %578 = vset.pattern.permute.xlu0 0
        %579 = vperm.xlu0 %578, %v241
        %v580 = vpop.permute.xlu0 %579
        %v582 = vlaneseq
        %v583 = vshrl.u32 %v582, 7
        %v584 = vsub.s32 0, %v583
        %v585 = vrot.slane %v580, %v584
        %v586 = vadd.f32 %v566, %v585
        %v587 = vadd.f32 %v576, %v585
        %v590 = vcombine.low %v586, %v587
        %v592 = vunpack.c.l.s4 1966171168
        %v593 = vunpack.c.0.s8 %v592
        %v594 = vlaneseq
        %v595 = vshrl.u32 %v594, 7
        %v596 = vsub.s32 %v593, %v595
        %v597 = vrot.slane %v590, %v596
        %v599 = vunpack.c.l.s4 1966171168
        %v600 = vunpack.c.0.s8 %v599
        %v601 = vlaneseq
        %v602 = vshrl.u32 %v601, 7
        %v603 = vsub.s32 %v600, %v602
        %v604 = vrot.slane %v597, %v603
        %s606 = scalar_lea.vmem %s223, %s252
        %v607 = vlaneseq
        %vm608 = vcmp.ge.s32.totalorder %v607, 0
        %vm609 = vcmp.lt.s32.totalorder %v607, 256
        %vm610 = vmand %vm608, %vm609
        %611 = vst.msk [vmem:[%s606] sm:$0x3] %vm610, %v604
      $region45: #{sine_model_forward.1} parent=39 // loop_footer
        %s250 = sadd.s32 1, %s246
      $region46: #{sine_model_forward.1} parent=39 // loop_footer_branch
        %245 = sbr.rel target = $region42
      $region47: #{sine_model_forward.1} parent=39 // loop_exit
        _
      %s612 = smul.u32 4, %s18
      %p613 = scmp.lt.s32.totalorder %s612, 7
      %s614 = scalar_select %p613, %s612, 7
      %s615 = scalar_lea.vmem %s5, %s614
      // Predicated region
      $region48: #{sine_model_forward.1} parent=39 // pred_check
        %p616 = pneg %p146
      $region49: #{sine_model_forward.1} parent=39 // pred_check_branch
        %618 = sbr.rel (%p616) target = $region51
      $region50: #{sine_model_forward.1} parent=39 // pred_region
        %s619 = smul.u32 4, %s18
      $region51: #{sine_model_forward.1} parent=39 // pred_fallthru
        _
    $region40: #{sine_model_forward.1} parent=5 // pred_fallthru
      _
    %p620 = scmp.le.s32.totalorder 2, %s13
    // Predicated region
    $region52: #{sine_model_forward.1} parent=5 // pred_check
      %p621 = pneg %p620
    $region53: #{sine_model_forward.1} parent=5 // pred_check_branch
      %623 = sbr.rel (%p621) target = $region55
    $region54: #{sine_model_forward.1} parent=5 // pred_region
      %s624 = ssub.s32 %s13, 2
      // Predicated region
      $region56: #{sine_model_forward.1} parent=54 // pred_check
        %p625 = pneg %p152
      $region57: #{sine_model_forward.1} parent=54 // pred_check_branch
        %627 = sbr.rel (%p625) target = $region59
      $region58: #{sine_model_forward.1} parent=54 // pred_region
        %s628 = smul.u32 4, %s19
        %p629 = scmp.lt.s32.totalorder %s628, 7
        %s630 = scalar_select %p629, %s628, 7
        %s631 = scalar_lea.vmem %s5, %s630
      $region59: #{sine_model_forward.1} parent=54 // pred_fallthru
        _
    $region55: #{sine_model_forward.1} parent=5 // pred_fallthru
      _
  $region6: #{sine_model_forward.1} parent=0 // loop_footer
    %s17 = sadd.s32 1, %s13
  $region7: #{sine_model_forward.1} parent=0 // loop_footer_branch
    %12 = sbr.rel target = $region3
  $region8: #{sine_model_forward.1} parent=0 // loop_exit
    _

</llo_original>
